<compile_context>
chip_gen: v5e
topology: v5e:2x2
jax: 0.10.0
libtpu: 0.0.40
codegen_flags: <defaults>
</compile_context>

<pallas_src>
import jax
import jax.numpy as jnp
from jax.experimental import pallas as pl
from jax.experimental.pallas import tpu as pltpu


def _ce_kernel(logits_ref, gt_ref, w_ref, partial_ref, num_acc, den_acc):
    b = pl.program_id(1)
    s = pl.program_id(2)
    nb = pl.num_programs(1)
    ns = pl.num_programs(2)

    C = logits_ref.shape[1]   # static, small (segmentation-sized)
    TR = logits_ref.shape[2]  # static, multiple of 8

    @pl.when(jnp.logical_and(b == 0, s == 0))
    def _():
        num_acc[...] = jnp.zeros_like(num_acc)
        den_acc[...] = jnp.zeros_like(den_acc)

    t = gt_ref[0].astype(jnp.int32)                                   # (TR, 128)
    xs = [logits_ref[0, c].astype(jnp.float32) for c in range(C)]     # C x (TR, 128)

    # Numerically stable log-sum-exp over the class axis, fully unrolled into
    # dense VPU max/add + EUP exp ops (no cross-lane XLU work in steady state).
    # Note: the unroll is intended for small C (<= ~32); for much larger C a
    # sublane-axis reduction over a stacked (C, TR, 128) tile would be preferable.
    m = xs[0]
    for c in range(1, C):
        m = jnp.maximum(m, xs[c])
    se = jnp.exp(xs[0] - m)
    for c in range(1, C):
        se = se + jnp.exp(xs[c] - m)
    lse = jnp.log(se) + m                                             # (TR, 128)

    # Per-class masked select of the target logit and its class weight.
    # Weights are scalar reads from SMEM; no (TR, 128, C) one-hot temporaries.
    # Out-of-range targets (e.g. padding label == C, or PyTorch's ignore_index)
    # get zero weight and contribute nothing to numerator or denominator.
    mask0 = (t == 0).astype(jnp.float32)
    tgt_logit = mask0 * xs[0]
    tgt_w = mask0 * w_ref[0]
    for c in range(1, C):
        mc = (t == c).astype(jnp.float32)
        tgt_logit = tgt_logit + mc * xs[c]
        tgt_w = tgt_w + mc * w_ref[c]

    num_tile = tgt_w * (lse - tgt_logit)                              # (TR, 128)
    den_tile = tgt_w

    # Fold the TR rows down to one dense (8, 128) vreg tile (tile-aligned reshape,
    # dense VPU adds) so the resident accumulators stay tiny.
    g = TR // 8
    num_acc[...] += num_tile.reshape(g, 8, 128).sum(axis=0)
    den_acc[...] += den_tile.reshape(g, 8, 128).sum(axis=0)

    @pl.when(jnp.logical_and(b == nb - 1, s == ns - 1))
    def _():
        num = jnp.sum(num_acc[...])
        den = jnp.sum(den_acc[...])
        sub = jax.lax.broadcasted_iota(jnp.int32, (8, 128), 0)
        # row 0 carries num, row 1 carries den; rest zero.
        partial_ref[0] = jnp.where(sub == 0, num, jnp.where(sub == 1, den, 0.0))


def _choose_tiling(S, C, itemsize, target_bytes=2 * 1024 * 1024):
    """Pick (tile_r, r_pad): row-tile size (multiple of 8) and padded row count.

    Rows are 128-lane groups of the flattened spatial axis; the logits block is
    C * tile_r * 128 * itemsize bytes (~target_bytes).
    """
    r = -(-S // 128)            # 128-lane rows needed (ceil)
    r = -(-r // 8) * 8          # pad rows to a multiple of 8 (dense sublanes)
    tr = max(8, ((target_bytes // (C * 128 * itemsize)) // 8) * 8)
    tr = min(tr, r)
    # Largest multiple-of-8 divisor of r that is <= tr (always succeeds at 8).
    t = tr
    while t > 8 and r % t != 0:
        t -= 8
    if t * 4 >= tr:
        return t, r
    # Best divisor is tiny relative to the target: pad the rows instead (costs one
    # HBM copy of the logits in the wrapper, but keeps big, pipeline-friendly tiles).
    return tr, -(-r // tr) * tr


def cross_entropy_loss(gt, logits, weight=None):
    """gt: [B, 1, H, W] (int), logits: [B, C, H, W] (float).  Returns scalar f32 loss.

    Matches F.cross_entropy(logits.float(), gt.squeeze(1), weight=weight,
    reduction='mean'): sum_i w[t_i] * nll_i / sum_i w[t_i].
    """
    B, C, H, W = logits.shape
    assert C > 2, "For class num 1 or 2, use BecLoss instead"
    S = H * W

    # NCHW consumed directly: free reshapes only -- no transpose and no f32 upcast
    # of the dominant logits stream in HBM (kernel casts tiles on-chip).
    x = logits.reshape(B, C, S)
    t = gt.reshape(B, S)
    if t.dtype != jnp.int32:
        # Only widen/cast when the input is not already 32-bit int (no extra HBM
        # pass for the common int32 case).
        t = t.astype(jnp.int32)
    if weight is None:
        w = jnp.ones((C,), dtype=jnp.float32)
    else:
        w = jnp.asarray(weight, dtype=jnp.float32).reshape(C)

    tile_r, r_pad = _choose_tiling(S, C, x.dtype.itemsize)
    s_pad = r_pad * 128
    if s_pad != S:
        # Pad the spatial axis; padded pixels get label == C (out of range) so they
        # receive zero weight and contribute nothing.
        x = jnp.pad(x, ((0, 0), (0, 0), (0, s_pad - S)))
        t = jnp.pad(t, ((0, 0), (0, s_pad - S)), constant_values=C)
    x = x.reshape(B, C, r_pad, 128)
    t = t.reshape(B, r_pad, 128)

    nr = r_pad // tile_r

    # Megacore shard axis independent of batch parity: prefer splitting the
    # spatial-tile axis; fall back to batch; else single shard.  Each shard gets
    # its own accumulator scratch instance and its own output block.
    if nr % 2 == 0:
        num_shards, shard_spatial = 2, True
    elif B % 2 == 0:
        num_shards, shard_spatial = 2, False
    else:
        num_shards, shard_spatial = 1, False

    bpc = B // num_shards if (num_shards == 2 and not shard_spatial) else B
    nsc = nr // num_shards if (num_shards == 2 and shard_spatial) else nr

    if shard_spatial:
        def b_of(p, b):
            return b

        def s_of(p, s):
            return p * nsc + s
    else:
        def b_of(p, b):
            return p * bpc + b

        def s_of(p, s):
            return s

    partials = pl.pallas_call(
        _ce_kernel,
        out_shape=jax.ShapeDtypeStruct((num_shards, 8, 128), jnp.float32),
        grid_spec=pltpu.PrefetchScalarGridSpec(
            num_scalar_prefetch=0,
            grid=(num_shards, bpc, nsc),
            in_specs=[
                pl.BlockSpec((1, C, tile_r, 128),
                             lambda p, b, s: (b_of(p, b), 0, s_of(p, s), 0)),
                pl.BlockSpec((1, tile_r, 128),
                             lambda p, b, s: (b_of(p, b), s_of(p, s), 0)),
                pl.BlockSpec(memory_space=pltpu.MemorySpace.SMEM),  # class weights
            ],
            out_specs=pl.BlockSpec((1, 8, 128), lambda p, b, s: (p, 0, 0)),
            scratch_shapes=[
                pltpu.VMEM((8, 128), jnp.float32),  # weighted-NLL partial sums
                pltpu.VMEM((8, 128), jnp.float32),  # weight partial sums
            ],
        ),
        compiler_params=pltpu.CompilerParams(
            dimension_semantics=("parallel", "arbitrary", "arbitrary"),
            vmem_limit_bytes=32 * 1024 * 1024,  # safe on v5e/v6e/v7x
        ),
    )(x, t, w)

    num = jnp.sum(partials[:, 0, 0])
    den = jnp.sum(partials[:, 1, 0])
    return num / den


def _reference_loss(gt, logits, weight):
    """Pure-JAX reference mirroring F.cross_entropy(reduction='mean', weight=weight)."""
    B, C, H, W = logits.shape
    x = jnp.transpose(logits, (0, 2, 3, 1)).reshape(-1, C).astype(jnp.float32)
    t = gt.reshape(-1).astype(jnp.int32)
    w = jnp.asarray(weight, dtype=jnp.float32)
    logp = jax.nn.log_softmax(x, axis=-1)
    nll = -jnp.take_along_axis(logp, t[:, None], axis=-1)[:, 0]
    wt = w[t]
    return jnp.sum(wt * nll) / jnp.sum(wt)


if __name__ == "__main__":
    key = jax.random.PRNGKey(0)
    k1, k2, k3, k4 = jax.random.split(key, 4)

    # Case 1: weighted, even batch (exercises the 2-shard path + spatial padding).
    B, C, H, W = 2, 4, 16, 16
    logits = jax.random.normal(k1, (B, C, H, W), dtype=jnp.float32)
    gt = jax.random.randint(k2, (B, 1, H, W), 0, C, dtype=jnp.int32)
    class_weight = jnp.array([0.5, 1.0, 1.5, 2.0], dtype=jnp.float32)

    loss = cross_entropy_loss(gt, logits, weight=class_weight)
    jax.block_until_ready(loss)
    ref = _reference_loss(gt, logits, class_weight)
    assert jnp.allclose(loss, ref, rtol=1e-5, atol=1e-5), (loss, ref)

    # Case 2: unweighted path must match plain mean cross-entropy.
    loss_u = cross_entropy_loss(gt, logits)
    jax.block_until_ready(loss_u)
    ref_u = _reference_loss(gt, logits, jnp.ones((C,), jnp.float32))
    assert jnp.allclose(loss_u, ref_u, rtol=1e-5, atol=1e-5), (loss_u, ref_u)

    # Case 3: odd batch, spatial size not a multiple of 128 (single-shard path).
    B2, C2, H2, W2 = 1, 5, 20, 20
    logits2 = jax.random.normal(k3, (B2, C2, H2, W2), dtype=jnp.float32)
    gt2 = jax.random.randint(k4, (B2, 1, H2, W2), 0, C2, dtype=jnp.int32)
    loss2 = cross_entropy_loss(gt2, logits2)
    jax.block_until_ready(loss2)
    ref2 = _reference_loss(gt2, logits2, jnp.ones((C2,), jnp.float32))
    assert jnp.allclose(loss2, ref2, rtol=1e-5, atol=1e-5), (loss2, ref2)

    print("KERNEL_OK")
</pallas_src>

<mosaic_0001>
module attributes {stable_mosaic.version = 11 : i64} {
  func.func @_ce_kernel(%arg0: i32, %arg1: i32, %arg2: i32, %arg3: memref<1x4x8x128xf32, #tpu.memory_space<vmem>>, %arg4: memref<1x8x128xi32, #tpu.memory_space<vmem>>, %arg5: memref<4xf32, #tpu.memory_space<smem>>, %arg6: memref<1x8x128xf32, #tpu.memory_space<vmem>>, %arg7: memref<8x128xf32, #tpu.memory_space<vmem>>, %arg8: memref<8x128xf32, #tpu.memory_space<vmem>>) attributes {dimension_semantics = [#tpu.dimension_semantics<parallel>, #tpu.dimension_semantics<arbitrary>, #tpu.dimension_semantics<arbitrary>], iteration_bounds = array<i64: 2, 1, 1>, scalar_prefetch = 0 : i64, scratch_operands = 2 : i64, tpu.core_type = #tpu.core_type<tc>, window_params = [{transform_indices = @transform_0, window_bounds = array<i64: 1, 4, 8, 128>}, {transform_indices = @transform_1, window_bounds = array<i64: 1, 8, 128>}, {transform_indices = @transform_2, window_bounds = array<i64: 4>}, {transform_indices = @transform_3, window_bounds = array<i64: 1, 8, 128>}]} {
    %c0_i32 = arith.constant 0 : i32
    %0 = arith.cmpi eq, %arg1, %c0_i32 : i32
    %c0_i32_0 = arith.constant 0 : i32
    %1 = arith.cmpi eq, %arg2, %c0_i32_0 : i32
    %2 = arith.andi %0, %1 : i1
    %3 = arith.extui %2 : i1 to i32
    %c0_i32_1 = arith.constant 0 : i32
    %4 = arith.cmpi ne, %3, %c0_i32_1 : i32
    scf.if %4 {
      %cst_34 = arith.constant 0.000000e+00 : f32
      %86 = vector.broadcast %cst_34 : f32 to vector<8x128xf32>
      %c0_35 = arith.constant 0 : index
      %c0_36 = arith.constant 0 : index
      %87 = vector.load %arg7[%c0_35, %c0_36] : memref<8x128xf32, #tpu.memory_space<vmem>>, vector<8x128xf32>
      tpu.vector_store %arg7[%c0_35, %c0_36], %86 {strides = array<i32>} : memref<8x128xf32, #tpu.memory_space<vmem>>, vector<8x128xf32>,
      %cst_37 = arith.constant 0.000000e+00 : f32
      %88 = vector.broadcast %cst_37 : f32 to vector<8x128xf32>
      %c0_38 = arith.constant 0 : index
      %c0_39 = arith.constant 0 : index
      %89 = vector.load %arg8[%c0_38, %c0_39] : memref<8x128xf32, #tpu.memory_space<vmem>>, vector<8x128xf32>
      tpu.vector_store %arg8[%c0_38, %c0_39], %88 {strides = array<i32>} : memref<8x128xf32, #tpu.memory_space<vmem>>, vector<8x128xf32>,
    } else {
    }
    %c0 = arith.constant 0 : index
    %c0_2 = arith.constant 0 : index
    %c0_3 = arith.constant 0 : index
    %5 = vector.load %arg4[%c0, %c0_2, %c0_3] : memref<1x8x128xi32, #tpu.memory_space<vmem>>, vector<1x8x128xi32>
    %6 = vector.shape_cast %5 : vector<1x8x128xi32> to vector<8x128xi32>
    %c0_4 = arith.constant 0 : index
    %c0_5 = arith.constant 0 : index
    %c0_6 = arith.constant 0 : index
    %c0_7 = arith.constant 0 : index
    %7 = vector.load %arg3[%c0_4, %c0_5, %c0_6, %c0_7] : memref<1x4x8x128xf32, #tpu.memory_space<vmem>>, vector<1x1x8x128xf32>
    %8 = vector.shape_cast %7 : vector<1x1x8x128xf32> to vector<8x128xf32>
    %c0_8 = arith.constant 0 : index
    %c1 = arith.constant 1 : index
    %c0_9 = arith.constant 0 : index
    %c0_10 = arith.constant 0 : index
    %9 = vector.load %arg3[%c0_8, %c1, %c0_9, %c0_10] : memref<1x4x8x128xf32, #tpu.memory_space<vmem>>, vector<1x1x8x128xf32>
    %10 = vector.shape_cast %9 : vector<1x1x8x128xf32> to vector<8x128xf32>
    %c0_11 = arith.constant 0 : index
    %c2 = arith.constant 2 : index
    %c0_12 = arith.constant 0 : index
    %c0_13 = arith.constant 0 : index
    %11 = vector.load %arg3[%c0_11, %c2, %c0_12, %c0_13] : memref<1x4x8x128xf32, #tpu.memory_space<vmem>>, vector<1x1x8x128xf32>
    %12 = vector.shape_cast %11 : vector<1x1x8x128xf32> to vector<8x128xf32>
    %c0_14 = arith.constant 0 : index
    %c3 = arith.constant 3 : index
    %c0_15 = arith.constant 0 : index
    %c0_16 = arith.constant 0 : index
    %13 = vector.load %arg3[%c0_14, %c3, %c0_15, %c0_16] : memref<1x4x8x128xf32, #tpu.memory_space<vmem>>, vector<1x1x8x128xf32>
    %14 = vector.shape_cast %13 : vector<1x1x8x128xf32> to vector<8x128xf32>
    %15 = arith.maximumf %8, %10 : vector<8x128xf32>
    %16 = arith.maximumf %15, %12 : vector<8x128xf32>
    %17 = arith.maximumf %16, %14 : vector<8x128xf32>
    %18 = arith.subf %8, %17 : vector<8x128xf32>
    %19 = math.exp %18 : vector<8x128xf32>
    %20 = arith.subf %10, %17 : vector<8x128xf32>
    %21 = math.exp %20 : vector<8x128xf32>
    %22 = arith.addf %19, %21 : vector<8x128xf32>
    %23 = arith.subf %12, %17 : vector<8x128xf32>
    %24 = math.exp %23 : vector<8x128xf32>
    %25 = arith.addf %22, %24 : vector<8x128xf32>
    %26 = arith.subf %14, %17 : vector<8x128xf32>
    %27 = math.exp %26 : vector<8x128xf32>
    %28 = arith.addf %25, %27 : vector<8x128xf32>
    %29 = math.log %28 : vector<8x128xf32>
    %30 = arith.addf %29, %17 : vector<8x128xf32>
    %c0_i32_17 = arith.constant 0 : i32
    %31 = vector.broadcast %c0_i32_17 : i32 to vector<8x128xi32>
    %32 = arith.cmpi eq, %6, %31 : vector<8x128xi32>
    %33 = arith.extui %32 : vector<8x128xi1> to vector<8x128xi32>
    %34 = arith.sitofp %33 : vector<8x128xi32> to vector<8x128xf32>
    %35 = arith.mulf %34, %8 : vector<8x128xf32>
    %c0_18 = arith.constant 0 : index
    %36 = memref.load %arg5[%c0_18] : memref<4xf32, #tpu.memory_space<smem>>
    %37 = vector.broadcast %36 : f32 to vector<8x128xf32>
    %38 = arith.mulf %34, %37 : vector<8x128xf32>
    %c1_i32 = arith.constant 1 : i32
    %39 = vector.broadcast %c1_i32 : i32 to vector<8x128xi32>
    %40 = arith.cmpi eq, %6, %39 : vector<8x128xi32>
    %41 = arith.extui %40 : vector<8x128xi1> to vector<8x128xi32>
    %42 = arith.sitofp %41 : vector<8x128xi32> to vector<8x128xf32>
    %43 = arith.mulf %42, %10 : vector<8x128xf32>
    %44 = arith.addf %35, %43 : vector<8x128xf32>
    %c1_19 = arith.constant 1 : index
    %45 = memref.load %arg5[%c1_19] : memref<4xf32, #tpu.memory_space<smem>>
    %46 = vector.broadcast %45 : f32 to vector<8x128xf32>
    %47 = arith.mulf %42, %46 : vector<8x128xf32>
    %48 = arith.addf %38, %47 : vector<8x128xf32>
    %c2_i32 = arith.constant 2 : i32
    %49 = vector.broadcast %c2_i32 : i32 to vector<8x128xi32>
    %50 = arith.cmpi eq, %6, %49 : vector<8x128xi32>
    %51 = arith.extui %50 : vector<8x128xi1> to vector<8x128xi32>
    %52 = arith.sitofp %51 : vector<8x128xi32> to vector<8x128xf32>
    %53 = arith.mulf %52, %12 : vector<8x128xf32>
    %54 = arith.addf %44, %53 : vector<8x128xf32>
    %c2_20 = arith.constant 2 : index
    %55 = memref.load %arg5[%c2_20] : memref<4xf32, #tpu.memory_space<smem>>
    %56 = vector.broadcast %55 : f32 to vector<8x128xf32>
    %57 = arith.mulf %52, %56 : vector<8x128xf32>
    %58 = arith.addf %48, %57 : vector<8x128xf32>
    %c3_i32 = arith.constant 3 : i32
    %59 = vector.broadcast %c3_i32 : i32 to vector<8x128xi32>
    %60 = arith.cmpi eq, %6, %59 : vector<8x128xi32>
    %61 = arith.extui %60 : vector<8x128xi1> to vector<8x128xi32>
    %62 = arith.sitofp %61 : vector<8x128xi32> to vector<8x128xf32>
    %63 = arith.mulf %62, %14 : vector<8x128xf32>
    %64 = arith.addf %54, %63 : vector<8x128xf32>
    %c3_21 = arith.constant 3 : index
    %65 = memref.load %arg5[%c3_21] : memref<4xf32, #tpu.memory_space<smem>>
    %66 = vector.broadcast %65 : f32 to vector<8x128xf32>
    %67 = arith.mulf %62, %66 : vector<8x128xf32>
    %68 = arith.addf %58, %67 : vector<8x128xf32>
    %69 = arith.subf %30, %64 : vector<8x128xf32>
    %70 = arith.mulf %68, %69 : vector<8x128xf32>
    %c0_22 = arith.constant 0 : index
    %c0_23 = arith.constant 0 : index
    %71 = vector.load %arg7[%c0_22, %c0_23] : memref<8x128xf32, #tpu.memory_space<vmem>>, vector<8x128xf32>
    %72 = vector.shape_cast %70 : vector<8x128xf32> to vector<1x8x128xf32>
    %cst = arith.constant dense<0.000000e+00> : vector<8x128xf32>
    %73 = vector.multi_reduction <add>, %72, %cst [0] : vector<1x8x128xf32> to vector<8x128xf32>
    %74 = arith.addf %71, %73 : vector<8x128xf32>
    %c0_24 = arith.constant 0 : index
    %c0_25 = arith.constant 0 : index
    %75 = vector.load %arg7[%c0_24, %c0_25] : memref<8x128xf32, #tpu.memory_space<vmem>>, vector<8x128xf32>
    tpu.vector_store %arg7[%c0_24, %c0_25], %74 {strides = array<i32>} : memref<8x128xf32, #tpu.memory_space<vmem>>, vector<8x128xf32>,
    %c0_26 = arith.constant 0 : index
    %c0_27 = arith.constant 0 : index
    %76 = vector.load %arg8[%c0_26, %c0_27] : memref<8x128xf32, #tpu.memory_space<vmem>>, vector<8x128xf32>
    %77 = vector.shape_cast %68 : vector<8x128xf32> to vector<1x8x128xf32>
    %cst_28 = arith.constant dense<0.000000e+00> : vector<8x128xf32>
    %78 = vector.multi_reduction <add>, %77, %cst_28 [0] : vector<1x8x128xf32> to vector<8x128xf32>
    %79 = arith.addf %76, %78 : vector<8x128xf32>
    %c0_29 = arith.constant 0 : index
    %c0_30 = arith.constant 0 : index
    %80 = vector.load %arg8[%c0_29, %c0_30] : memref<8x128xf32, #tpu.memory_space<vmem>>, vector<8x128xf32>
    tpu.vector_store %arg8[%c0_29, %c0_30], %79 {strides = array<i32>} : memref<8x128xf32, #tpu.memory_space<vmem>>, vector<8x128xf32>,
    %c0_i32_31 = arith.constant 0 : i32
    %81 = arith.cmpi eq, %arg1, %c0_i32_31 : i32
    %c0_i32_32 = arith.constant 0 : i32
    %82 = arith.cmpi eq, %arg2, %c0_i32_32 : i32
    %83 = arith.andi %81, %82 : i1
    %84 = arith.extui %83 : i1 to i32
    %c0_i32_33 = arith.constant 0 : i32
    %85 = arith.cmpi ne, %84, %c0_i32_33 : i32
    scf.if %85 {
      %c0_34 = arith.constant 0 : index
      %c0_35 = arith.constant 0 : index
      %86 = vector.load %arg7[%c0_34, %c0_35] : memref<8x128xf32, #tpu.memory_space<vmem>>, vector<8x128xf32>
      %87 = vector.shape_cast %86 : vector<8x128xf32> to vector<1x8x128xf32>
      %cst_36 = arith.constant dense<0.000000e+00> : vector<1xf32>
      %88 = vector.multi_reduction <add>, %87, %cst_36 [1, 2] : vector<1x8x128xf32> to vector<1xf32>
      %89 = vector.shape_cast %88 : vector<1xf32> to vector<1x1x1xf32>
      %90 = vector.extract %89[0, 0, 0] : f32 from vector<1x1x1xf32>
      %c0_37 = arith.constant 0 : index
      %c0_38 = arith.constant 0 : index
      %91 = vector.load %arg8[%c0_37, %c0_38] : memref<8x128xf32, #tpu.memory_space<vmem>>, vector<8x128xf32>
      %92 = vector.shape_cast %91 : vector<8x128xf32> to vector<1x8x128xf32>
      %cst_39 = arith.constant dense<0.000000e+00> : vector<1xf32>
      %93 = vector.multi_reduction <add>, %92, %cst_39 [1, 2] : vector<1x8x128xf32> to vector<1xf32>
      %94 = vector.shape_cast %93 : vector<1xf32> to vector<1x1x1xf32>
      %95 = vector.extract %94[0, 0, 0] : f32 from vector<1x1x1xf32>
      %96 = tpu.iota {dimensions = array<i32: 0>} : vector<8x128xi32>
      %c0_i32_40 = arith.constant 0 : i32
      %97 = vector.broadcast %c0_i32_40 : i32 to vector<8x128xi32>
      %98 = arith.cmpi eq, %96, %97 : vector<8x128xi32>
      %c1_i32_41 = arith.constant 1 : i32
      %99 = vector.broadcast %c1_i32_41 : i32 to vector<8x128xi32>
      %100 = arith.cmpi eq, %96, %99 : vector<8x128xi32>
      %cst_42 = arith.constant 0.000000e+00 : f32
      %101 = vector.broadcast %95 : f32 to vector<8x128xf32>
      %102 = vector.broadcast %cst_42 : f32 to vector<8x128xf32>
      %103 = arith.select %100, %101, %102 : vector<8x128xi1>, vector<8x128xf32>
      %104 = vector.broadcast %90 : f32 to vector<8x128xf32>
      %105 = arith.select %98, %104, %103 : vector<8x128xi1>, vector<8x128xf32>
      %c0_43 = arith.constant 0 : index
      %c0_44 = arith.constant 0 : index
      %c0_45 = arith.constant 0 : index
      %106 = vector.load %arg6[%c0_43, %c0_44, %c0_45] : memref<1x8x128xf32, #tpu.memory_space<vmem>>, vector<1x8x128xf32>
      %107 = vector.shape_cast %106 : vector<1x8x128xf32> to vector<8x128xf32>
      %108 = vector.shape_cast %105 : vector<8x128xf32> to vector<1x8x128xf32>
      tpu.vector_store %arg6[%c0_43, %c0_44, %c0_45], %108 {strides = array<i32>} : memref<1x8x128xf32, #tpu.memory_space<vmem>>, vector<1x8x128xf32>,
    } else {
    }
    return
  }
  func.func @transform_0(%arg0: i32, %arg1: i32, %arg2: i32) -> (i32, i32, i32, i32) {
    %c1_i32 = arith.constant 1 : i32
    %0 = arith.muli %arg0, %c1_i32 : i32
    %1 = arith.addi %0, %arg1 : i32
    %c0_i32 = arith.constant 0 : i32
    %c0_i32_0 = arith.constant 0 : i32
    %c0_i32_1 = arith.constant 0 : i32
    return %1, %c0_i32, %arg2, %c0_i32_0 : i32, i32, i32, i32
  }
  func.func @transform_1(%arg0: i32, %arg1: i32, %arg2: i32) -> (i32, i32, i32) {
    %c1_i32 = arith.constant 1 : i32
    %0 = arith.muli %arg0, %c1_i32 : i32
    %1 = arith.addi %0, %arg1 : i32
    %c0_i32 = arith.constant 0 : i32
    %c0_i32_0 = arith.constant 0 : i32
    return %1, %arg2, %c0_i32 : i32, i32, i32
  }
  func.func @transform_2(%arg0: i32, %arg1: i32, %arg2: i32) -> i32 {
    %c0_i32 = arith.constant 0 : i32
    %c0_i32_0 = arith.constant 0 : i32
    return %c0_i32 : i32
  }
  func.func @transform_3(%arg0: i32, %arg1: i32, %arg2: i32) -> (i32, i32, i32) {
    %c0_i32 = arith.constant 0 : i32
    %c0_i32_0 = arith.constant 0 : i32
    %c0_i32_1 = arith.constant 0 : i32
    return %arg0, %c0_i32, %c0_i32_0 : i32, i32, i32
  }
}

</mosaic_0001>

<llo_original>
// kernel: tpu_custom_call.1
$region0: #{tpu_custom_call.1}
  #allocation0 [shape = 'u32[]', space=smem, size = 0x4, offset = 0x4, fixed_abs, tag = 'smem constant byte address 0x4 - core index']
  #allocation1 [shape = 'u32[72,128]{1,0:T(1,128)}', space=vmem, size = 0x9000, scoped, tag = 'internal scratch']
  #allocation2 [shape = 'f32[8,128]{1,0:T(8,128)}', space=vmem, size = 0x1000, scoped, tag = 'scratch operand']
  #allocation3 [shape = 'f32[8,128]{1,0:T(8,128)}', space=vmem, size = 0x1000, scoped, tag = 'scratch operand']
  %s0 = inlined_call_operand.hbm [shape: f32[2,4,8,128], index: 0, kind: input, shape index: {}]
  %s1 = inlined_call_operand.hbm [shape: s32[2,8,128], index: 1, kind: input, shape index: {}]
  %s2 = inlined_call_operand.vmem [shape: f32[4], index: 2, kind: input, shape index: {}]
  %s3 = inlined_call_operand.hbm [shape: f32[2,8,128], index: 3, kind: output, shape index: {}]
  %s4 = sld [smem:[#allocation0]]
  $region65: #{tpu_custom_call.1} parent=0
    _
  %s6 = ssub.s32 1, %s4
  %s7 = scalar_select 0, %s6, %s4
  $region1: #{tpu_custom_call.1} parent=0
    #allocation4 [shape = 'u8[32768]{0}', space=vmem, size = 0x8000, scoped, tag = 'input window, operand 0']
    #allocation5 [shape = 's32[2]{0}', space=sflag, size = 0x8, scoped, tag = 'scoped memory for tpu_custom_call.1']
    #allocation6 [shape = 's32[2]{0}', space=sflag, size = 0x8, scoped, tag = 'scoped memory for tpu_custom_call.1']
    #allocation7 [shape = 's32[2]{0}', space=sflag, size = 0x8, scoped, tag = 'scoped memory for tpu_custom_call.1']
    #allocation8 [shape = 'u8[8192]{0}', space=vmem, size = 0x2000, scoped, tag = 'input window, operand 1']
    #allocation9 [shape = 's32[2]{0}', space=sflag, size = 0x8, scoped, tag = 'scoped memory for tpu_custom_call.1']
    #allocation10 [shape = 'u8[512]{0}', space=smem, size = 0x200, scoped, tag = 'input window, operand 2, single buffered']
    #allocation11 [shape = 'u8[8192]{0}', space=vmem, size = 0x2000, scoped, tag = 'output window, operand 0']
    %8 = vsyncpa [#allocation5], 0
    %s9 = scalar_lea.sflag [#allocation5], 1
    %10 = vsyncpa %s9, 0
    %11 = vsyncpa [#allocation9], 0
    %s12 = scalar_lea.sflag [#allocation9], 1
    %13 = vsyncpa %s12, 0
    %14 = vsyncpa [#allocation7], 0
    %15 = vsyncpa [#allocation6], 0
    %s16 = scalar_lea.sflag [#allocation6], 1
    %17 = vsyncpa %s16, 0
    loop: start=0, step=1, limit=4
    $region2: #{tpu_custom_call.1} parent=1 // loop_pre_header
      _
    $region3: #{tpu_custom_call.1} parent=1 // loop_header
      %s19 = sphi 0, %s23
      %p20 = scmp.ge.s32.totalorder %s19, 4
      %s26 = sphi 0, %s45
      %s27 = sphi 0, %s41
      %s28 = sphi 0, %s37
      %s29 = sphi 0, %s26
      %s30 = sphi 0, %s27
      %s31 = sphi 0, %s28
      %s32 = sphi 0, %s29
      %s33 = sphi 0, %s30
      %s34 = sphi 0, %s31
      %s52 = sphi 0, %s54
      %s55 = sphi 0, %s52
      %s56 = sphi 0, %s55
      %s72 = sphi 0, %s56
      %s82 = sphi 0, %s84
      %s85 = sphi 0, %s82
      %s86 = sphi 0, %s85
      %s102 = sphi 0, %s86
      %s106 = sphi 0, %s106
      %s108 = sphi 0, %s106
      %s109 = sphi 0, %s108
      %s123 = sphi 0, %s109
      %s129 = sphi 0, %s131
      %s132 = sphi 0, %s129
      %s133 = sphi 0, %s132
      %s149 = sphi 0, %s133
    $region4: #{tpu_custom_call.1} parent=1 // loop_header_branch
      %22 = sbr.rel (%p20) target = $region8
    $region5: #{tpu_custom_call.1} parent=1 // loop_body
      %s24 = ssub.s32 %s19, 1
      %s25 = ssub.s32 %s19, 2
      %s35 = sadd.s32 1, %s28
      %p36 = scmp.ge.s32.totalorder %s35, 1
      %s37 = scalar_select %p36, 0, %s35
      %s38 = sadd.s32 1, %s27
      %s39 = scalar_select %p36, %s38, %s27
      %p40 = scmp.ge.s32.totalorder %s39, 1
      %s41 = scalar_select %p40, 0, %s39
      %s42 = sadd.s32 1, %s26
      %s43 = scalar_select %p40, %s42, %s26
      %p44 = scmp.ge.s32.totalorder %s43, 2
      %s45 = scalar_select %p44, 0, %s43
      %s46 = sadd.s32 %s26, %s27
      %s47 = sadd.s32 %s45, %s41
      %s48 = ssub.s32 %s46, %s47
      %s49 = ssub.s32 %s28, %s37
      %s50 = sor.u32 %s48, %s49
      %p51 = scmp.eq.s32.totalorder %s50, 0
      %s53 = sadd.s32 %s52, 1
      %s54 = scalar_select %p51, %s52, %s53
      %p57 = pneg %p51
      %p58 = scmp.eq.s32.totalorder %s19, 1
      %p59 = por %p57, %p58
      %p60 = scmp.ne.s32.totalorder %s52, %s55
      %p61 = scmp.eq.s32.totalorder %s19, 0
      %p62 = por %p60, %p61
      %p63 = scmp.ne.s32.totalorder %s52, %s55
      %p64 = scmp.eq.s32.totalorder %s24, 1
      %p65 = por %p63, %p64
      %p66 = scmp.ne.s32.totalorder %s55, %s56
      %p67 = scmp.eq.s32.totalorder %s24, 0
      %p68 = por %p66, %p67
      %p69 = scmp.ne.s32.totalorder %s55, %s56
      %p70 = scmp.eq.s32.totalorder %s25, 1
      %p71 = por %p69, %p70
      %p73 = scmp.ne.s32.totalorder %s56, %s72
      %p74 = scmp.eq.s32.totalorder %s25, 0
      %p75 = por %p73, %p74
      %s76 = sadd.s32 %s26, %s27
      %s77 = sadd.s32 %s45, %s41
      %s78 = ssub.s32 %s76, %s77
      %s79 = ssub.s32 %s28, %s37
      %s80 = sor.u32 %s78, %s79
      %p81 = scmp.eq.s32.totalorder %s80, 0
      %s83 = sadd.s32 %s82, 1
      %s84 = scalar_select %p81, %s82, %s83
      %p87 = pneg %p81
      %p88 = scmp.eq.s32.totalorder %s19, 1
      %p89 = por %p87, %p88
      %p90 = scmp.ne.s32.totalorder %s82, %s85
      %p91 = scmp.eq.s32.totalorder %s19, 0
      %p92 = por %p90, %p91
      %p93 = scmp.ne.s32.totalorder %s82, %s85
      %p94 = scmp.eq.s32.totalorder %s24, 1
      %p95 = por %p93, %p94
      %p96 = scmp.ne.s32.totalorder %s85, %s86
      %p97 = scmp.eq.s32.totalorder %s24, 0
      %p98 = por %p96, %p97
      %p99 = scmp.ne.s32.totalorder %s85, %s86
      %p100 = scmp.eq.s32.totalorder %s25, 1
      %p101 = por %p99, %p100
      %p103 = scmp.ne.s32.totalorder %s86, %s102
      %p104 = scmp.eq.s32.totalorder %s25, 0
      %p105 = por %p103, %p104
      %s107 = sadd.s32 %s106, 1
      %p110 = scmp.eq.s32.totalorder %s19, 1
      %p111 = scmp.ne.s32.totalorder %s106, %s108
      %p112 = scmp.eq.s32.totalorder %s19, 0
      %p113 = por %p111, %p112
      %p114 = scmp.ne.s32.totalorder %s106, %s108
      %p115 = scmp.eq.s32.totalorder %s24, 1
      %p116 = por %p114, %p115
      %p117 = scmp.ne.s32.totalorder %s108, %s109
      %p118 = scmp.eq.s32.totalorder %s24, 0
      %p119 = por %p117, %p118
      %p120 = scmp.ne.s32.totalorder %s108, %s109
      %p121 = scmp.eq.s32.totalorder %s25, 1
      %p122 = por %p120, %p121
      %p124 = scmp.ne.s32.totalorder %s109, %s123
      %p125 = scmp.eq.s32.totalorder %s25, 0
      %p126 = por %p124, %p125
      %s127 = ssub.s32 %s26, %s45
      %p128 = scmp.eq.s32.totalorder %s127, 0
      %s130 = sadd.s32 %s129, 1
      %s131 = scalar_select %p128, %s129, %s130
      %p134 = pneg %p128
      %p135 = scmp.eq.s32.totalorder %s19, 1
      %p136 = por %p134, %p135
      %p137 = scmp.ne.s32.totalorder %s129, %s132
      %p138 = scmp.eq.s32.totalorder %s19, 0
      %p139 = por %p137, %p138
      %p140 = scmp.ne.s32.totalorder %s129, %s132
      %p141 = scmp.eq.s32.totalorder %s24, 1
      %p142 = por %p140, %p141
      %p143 = scmp.ne.s32.totalorder %s132, %s133
      %p144 = scmp.eq.s32.totalorder %s24, 0
      %p145 = por %p143, %p144
      %p146 = scmp.ne.s32.totalorder %s132, %s133
      %p147 = scmp.eq.s32.totalorder %s25, 1
      %p148 = por %p146, %p147
      %p150 = scmp.ne.s32.totalorder %s133, %s149
      %p151 = scmp.eq.s32.totalorder %s25, 0
      %p152 = por %p150, %p151
      %p153 = scmp.le.s32.totalorder 1, %s19
      %p154 = scmp.lt.s32.totalorder %s19, 3
      %p155 = pnand %p153, %p154
      %p156 = pneg %p155
      // Predicated region
      $region9: #{tpu_custom_call.1} parent=5 // pred_check
        _
      $region10: #{tpu_custom_call.1} parent=5 // pred_check_branch
        %158 = sbr.rel (%p155) target = $region12
      $region11: #{tpu_custom_call.1} parent=5 // pred_region
        %s159 = ssub.s32 %s19, 1
        // Predicated region
        $region13: #{tpu_custom_call.1} parent=11 // pred_check
          %p160 = pneg %p119
        $region14: #{tpu_custom_call.1} parent=11 // pred_check_branch
          %162 = sbr.rel (%p160) target = $region16
        $region15: #{tpu_custom_call.1} parent=11 // pred_region
          %164 = vsyncadd [#allocation7], 0
          %s166 = sshll.u32 %s2, 4
          %s167 = int_to_ptr.vmem [resolvable:$true] %s166
          %169 = dma.vmem_to_smem %s167, 16, [#allocation10], [#allocation7]
        $region16: #{tpu_custom_call.1} parent=11 // pred_fallthru
          _
      $region12: #{tpu_custom_call.1} parent=5 // pred_fallthru
        _
      %p170 = scmp.lt.s32.totalorder %s19, 2
      // Predicated region
      $region17: #{tpu_custom_call.1} parent=5 // pred_check
        %p171 = pneg %p170
      $region18: #{tpu_custom_call.1} parent=5 // pred_check_branch
        %173 = sbr.rel (%p171) target = $region20
      $region19: #{tpu_custom_call.1} parent=5 // pred_region
        // Predicated region
        $region21: #{tpu_custom_call.1} parent=19 // pred_check
          %p174 = pneg %p62
        $region22: #{tpu_custom_call.1} parent=19 // pred_check_branch
          %176 = sbr.rel (%p174) target = $region24
        $region23: #{tpu_custom_call.1} parent=19 // pred_region
          %s177 = sand.u32 %s52, 1
          %s178 = scalar_lea.sflag [#allocation5], %s177
          %s179 = sand.u32 %s52, 1
          %s180 = smul.addr %s179, 32
          %s181 = scalar_lea.vmem [#allocation4], %s180
          %s182 = sadd.s32 %s26, %s27
          %184 = vsyncadd %s178, 0
          %s185 = smul.addr %s182, 4
          %s186 = sadd.s32 %s28, %s185
          %s187 = smul.addr %s186, 8
          %s188 = scalar_lea.hbm %s0, %s187
          %s189 = sshll.u32 %s188, 4
          %s190 = int_to_ptr.hbm [resolvable:$true] %s189
          %s191 = sshll.u32 %s181, 4
          %s192 = int_to_ptr.vmem [resolvable:$true] %s191
          %197 = dma.hbm_to_vmem [thread:$0]  %s190, 512, %s192, %s178, 128, 128, 8
        $region24: #{tpu_custom_call.1} parent=19 // pred_fallthru
          _
        // Predicated region
        $region25: #{tpu_custom_call.1} parent=19 // pred_check
          %p198 = pneg %p92
        $region26: #{tpu_custom_call.1} parent=19 // pred_check_branch
          %200 = sbr.rel (%p198) target = $region28
        $region27: #{tpu_custom_call.1} parent=19 // pred_region
          %s201 = sand.u32 %s82, 1
          %s202 = scalar_lea.sflag [#allocation9], %s201
          %s203 = sand.u32 %s82, 1
          %s204 = smul.addr %s203, 8
          %s205 = scalar_lea.vmem [#allocation8], %s204
          %s206 = sadd.s32 %s26, %s27
          %208 = vsyncadd %s202, 0
          %s209 = sadd.s32 %s28, %s206
          %s210 = smul.addr %s209, 8
          %s211 = scalar_lea.hbm %s1, %s210
          %s213 = sshll.u32 %s211, 4
          %s214 = int_to_ptr.hbm [resolvable:$true] %s213
          %s215 = sshll.u32 %s205, 4
          %s216 = int_to_ptr.vmem [resolvable:$true] %s215
          %218 = dma.hbm_to_vmem [thread:$0]  %s214, 128, %s216, %s202
        $region28: #{tpu_custom_call.1} parent=19 // pred_fallthru
          _
      $region20: #{tpu_custom_call.1} parent=5 // pred_fallthru
        _
      %p219 = scmp.le.s32.totalorder 1, %s19
      %p220 = scmp.lt.s32.totalorder %s19, 3
      %p221 = pnand %p219, %p220
      %p222 = pneg %p221
      // Predicated region
      $region29: #{tpu_custom_call.1} parent=5 // pred_check
        _
      $region30: #{tpu_custom_call.1} parent=5 // pred_check_branch
        %224 = sbr.rel (%p221) target = $region32
      $region31: #{tpu_custom_call.1} parent=5 // pred_region
        %s225 = ssub.s32 %s19, 1
        %s226 = sand.u32 %s55, 1
        %s227 = scalar_lea.sflag [#allocation5], %s226
        %s228 = sand.u32 %s55, 1
        %s229 = smul.addr %s228, 32
        %s230 = scalar_lea.vmem [#allocation4], %s229
        // Predicated region
        $region33: #{tpu_custom_call.1} parent=31 // pred_check
          %p231 = pneg %p68
        $region34: #{tpu_custom_call.1} parent=31 // pred_check_branch
          %233 = sbr.rel (%p231) target = $region36
        $region35: #{tpu_custom_call.1} parent=31 // pred_region
          %235 = dma.done %s227, 512
        $region36: #{tpu_custom_call.1} parent=31 // pred_fallthru
          _
        %s236 = sand.u32 %s85, 1
        %s237 = scalar_lea.sflag [#allocation9], %s236
        %s238 = sand.u32 %s85, 1
        %s239 = smul.addr %s238, 8
        %s240 = scalar_lea.vmem [#allocation8], %s239
        // Predicated region
        $region37: #{tpu_custom_call.1} parent=31 // pred_check
          %p241 = pneg %p98
        $region38: #{tpu_custom_call.1} parent=31 // pred_check_branch
          %243 = sbr.rel (%p241) target = $region40
        $region39: #{tpu_custom_call.1} parent=31 // pred_region
          %245 = dma.done %s237, 128
        $region40: #{tpu_custom_call.1} parent=31 // pred_fallthru
          _
        // Predicated region
        $region41: #{tpu_custom_call.1} parent=31 // pred_check
          %p246 = pneg %p119
        $region42: #{tpu_custom_call.1} parent=31 // pred_check_branch
          %248 = sbr.rel (%p246) target = $region44
        $region43: #{tpu_custom_call.1} parent=31 // pred_region
          %250 = dma.done [#allocation7], 16
        $region44: #{tpu_custom_call.1} parent=31 // pred_fallthru
          _
        %251 = sfence
        %s252 = sand.u32 %s55, 1
        %s253 = scalar_lea.sflag [#allocation5], %s252
        %s254 = sand.u32 %s55, 1
        %s255 = smul.addr %s254, 32
        %s256 = scalar_lea.vmem [#allocation4], %s255
        %p257 = pneg %p68
        %p258 = pneg %p65
        %s259 = sand.u32 %s85, 1
        %s260 = scalar_lea.sflag [#allocation9], %s259
        %s261 = sand.u32 %s85, 1
        %s262 = smul.addr %s261, 8
        %s263 = scalar_lea.vmem [#allocation8], %s262
        %p264 = pneg %p98
        %p265 = pneg %p95
        %p266 = pneg %p119
        %p267 = pneg %p116
        %p268 = pneg %p145
        %p269 = pneg %p142
        %s270 = sand.u32 %s132, 1
        %s271 = scalar_lea.sflag [#allocation6], %s270
        %s272 = sand.u32 %s132, 1
        %s273 = smul.addr %s272, 8
        %s274 = scalar_lea.vmem [#allocation11], %s273
        %s275 = sadd.s32 %s29, %s30
        %s276 = sadd.s32 %s29, %s30
        %p277 = scmp.eq.s32.totalorder %s30, 0
        %p278 = scmp.eq.s32.totalorder %s31, 0
        %p279 = pnand %p277, %p278
        %p280 = pneg %p279
        // Predicated region
        $region45: #{tpu_custom_call.1} parent=31 // pred_check
          _
        $region46: #{tpu_custom_call.1} parent=31 // pred_check_branch
          %282 = sbr.rel (%p279) target = $region48
        $region47: #{tpu_custom_call.1} parent=31 // pred_region
          %283 = vst [vmem:[#allocation2] sm:$0xff] 0.0
          %284 = vst [vmem:[#allocation3] sm:$0xff] 0.0
        $region48: #{tpu_custom_call.1} parent=31 // pred_fallthru
          _
        %v285 = vld [vmem:[%s240] sm:$0xff]
        %v286 = vld [vmem:[%s230] sm:$0xff]
        %s287 = scalar_lea.vmem %s230, 8 [#allocation4]
        %v288 = vld [vmem:[%s287] sm:$0xff]
        %s289 = scalar_lea.vmem %s230, 16 [#allocation4]
        %v290 = vld [vmem:[%s289] sm:$0xff]
        %s291 = scalar_lea.vmem %s230, 24 [#allocation4]
        %v292 = vld [vmem:[%s291] sm:$0xff]
        %v293 = vmax.f32 %v286, %v288
        %v294 = vmax.f32 %v293, %v290
        %v295 = vmax.f32 %v294, %v292
        %v296 = vsub.f32 %v286, %v295
        %v297 = vmul.f32 %v296, 1.442695
        %v298 = vpow.pop %v297
        %v299 = vsub.f32 %v288, %v295
        %v300 = vmul.f32 %v299, 1.442695
        %v301 = vpow.pop %v300
        %v302 = vadd.f32 %v298, %v301
        %v303 = vsub.f32 %v290, %v295
        %v304 = vmul.f32 %v303, 1.442695
        %v305 = vpow.pop %v304
        %v306 = vadd.f32 %v302, %v305
        %v307 = vsub.f32 %v292, %v295
        %v308 = vmul.f32 %v307, 1.442695
        %v309 = vpow.pop %v308
        %v310 = vadd.f32 %v306, %v309
        %v311 = vlog2.pop %v310
        %v312 = vmul.f32 %v311, 0.6931472
        %v313 = vadd.f32 %v312, %v295
        %vm314 = vcmp.eq.s32.totalorder %v285, 0
        %v315 = vsel %vm314, 1, 0
        %v316 = vcvt.s32.f32 %v315
        %v317 = vmul.f32 %v316, %v286
        %s318 = sld [smem:[#allocation10]]
        %v319 = vstv %s318
        %v320 = vmul.f32 %v316, %v319
        %vm321 = vcmp.eq.s32.totalorder %v285, 1
        %v322 = vsel %vm321, 1, 0
        %v323 = vcvt.s32.f32 %v322
        %v324 = vmul.f32 %v323, %v288
        %v325 = vadd.f32 %v317, %v324
        %s326 = sld [smem:[#allocation10 + $0x1]]
        %v327 = vstv %s326
        %v328 = vmul.f32 %v323, %v327
        %v329 = vadd.f32 %v320, %v328
        %vm330 = vcmp.eq.s32.totalorder %v285, 2
        %v331 = vsel %vm330, 1, 0
        %v332 = vcvt.s32.f32 %v331
        %v333 = vmul.f32 %v332, %v290
        %v334 = vadd.f32 %v325, %v333
        %s335 = sld [smem:[#allocation10 + $0x2]]
        %v336 = vstv %s335
        %v337 = vmul.f32 %v332, %v336
        %v338 = vadd.f32 %v329, %v337
        %vm339 = vcmp.eq.s32.totalorder %v285, 3
        %v340 = vsel %vm339, 1, 0
        %v341 = vcvt.s32.f32 %v340
        %v342 = vmul.f32 %v341, %v292
        %v343 = vadd.f32 %v334, %v342
        %s344 = sld [smem:[#allocation10 + $0x3]]
        %v345 = vstv %s344
        %v346 = vmul.f32 %v341, %v345
        %v347 = vadd.f32 %v338, %v346
        %v348 = vsub.f32 %v313, %v343
        %v349 = vmul.f32 %v347, %v348
        %v350 = vld [vmem:[#allocation2] sm:$0xff]
        %v351 = vadd.f32 %v349, 0.0
        %v352 = vadd.f32 %v350, %v351
        %353 = vst [vmem:[#allocation2] sm:$0xff] %v352
        %v354 = vld [vmem:[#allocation3] sm:$0xff]
        %v355 = vadd.f32 %v347, 0.0
        %v356 = vadd.f32 %v354, %v355
        %357 = vst [vmem:[#allocation3] sm:$0xff] %v356
        // Predicated region
        $region49: #{tpu_custom_call.1} parent=31 // pred_check
          _
        $region50: #{tpu_custom_call.1} parent=31 // pred_check_branch
          %359 = sbr.rel (%p279) target = $region52
        $region51: #{tpu_custom_call.1} parent=31 // pred_region
          %v360 = vld [vmem:[#allocation2] sm:$0xff]
          %361 = vadd.xlane.f32.xlu0 %v360
          %v362 = vpop.xlane.xlu0 %361
          %v363 = vrot.slane %v362, 4
          %v364 = vadd.f32 %v362, %v363
          %v365 = vrot.slane %v364, 2
          %v366 = vadd.f32 %v364, %v365
          %v367 = vrot.slane %v366, 1
          %v368 = vadd.f32 %v366, %v367
          %s369 = vtos %v368
          %v370 = vld [vmem:[#allocation3] sm:$0xff]
          %371 = vadd.xlane.f32.xlu0 %v370
          %v372 = vpop.xlane.xlu0 %371
          %v373 = vrot.slane %v372, 4
          %v374 = vadd.f32 %v372, %v373
          %v375 = vrot.slane %v374, 2
          %v376 = vadd.f32 %v374, %v375
          %v377 = vrot.slane %v376, 1
          %v378 = vadd.f32 %v376, %v377
          %s379 = vtos %v378
          %v380 = vlaneseq
          %v381 = vshrl.u32 %v380, 7
          %vm382 = vcmp.eq.s32.totalorder %v381, 0
          %vm383 = vcmp.eq.s32.totalorder %v381, 1
          %v384 = vstv %s379
          %v385 = vsel %vm383, %v384, 0.0
          %v386 = vstv %s369
          %v387 = vsel %vm382, %v386, %v385
          %388 = vst [vmem:[%s274] sm:$0xff] %v387
        $region52: #{tpu_custom_call.1} parent=31 // pred_fallthru
          _
        %s389 = sand.u32 %s132, 1
        %s390 = scalar_lea.sflag [#allocation6], %s389
        %s391 = sand.u32 %s132, 1
        %s392 = smul.addr %s391, 8
        %s393 = scalar_lea.vmem [#allocation11], %s392
        // Predicated region
        $region53: #{tpu_custom_call.1} parent=31 // pred_check
          %p394 = pneg %p142
        $region54: #{tpu_custom_call.1} parent=31 // pred_check_branch
          %396 = sbr.rel (%p394) target = $region56
        $region55: #{tpu_custom_call.1} parent=31 // pred_region
          %398 = vsyncadd %s390, 0
          %s399 = smul.addr %s29, 8
          %s400 = scalar_lea.hbm %s3, %s399
          %s402 = sshll.u32 %s393, 4
          %s403 = int_to_ptr.vmem [resolvable:$true] %s402
          %s404 = sshll.u32 %s400, 4
          %s405 = int_to_ptr.hbm [resolvable:$true] %s404
          %407 = dma.vmem_to_hbm [thread:$0]  %s403, 128, %s405, %s390
        $region56: #{tpu_custom_call.1} parent=31 // pred_fallthru
          _
      $region32: #{tpu_custom_call.1} parent=5 // pred_fallthru
        _
      %p408 = scmp.le.s32.totalorder 2, %s19
      // Predicated region
      $region57: #{tpu_custom_call.1} parent=5 // pred_check
        %p409 = pneg %p408
      $region58: #{tpu_custom_call.1} parent=5 // pred_check_branch
        %411 = sbr.rel (%p409) target = $region60
      $region59: #{tpu_custom_call.1} parent=5 // pred_region
        %s412 = ssub.s32 %s19, 2
        // Predicated region
        $region61: #{tpu_custom_call.1} parent=59 // pred_check
          %p413 = pneg %p148
        $region62: #{tpu_custom_call.1} parent=59 // pred_check_branch
          %415 = sbr.rel (%p413) target = $region64
        $region63: #{tpu_custom_call.1} parent=59 // pred_region
          %s416 = sand.u32 %s133, 1
          %s417 = scalar_lea.sflag [#allocation6], %s416
          %s418 = sand.u32 %s133, 1
          %s419 = smul.addr %s418, 8
          %s420 = scalar_lea.vmem [#allocation11], %s419
          %422 = dma.done %s417, 128
        $region64: #{tpu_custom_call.1} parent=59 // pred_fallthru
          _
      $region60: #{tpu_custom_call.1} parent=5 // pred_fallthru
        _
    $region6: #{tpu_custom_call.1} parent=1 // loop_footer
      %s23 = sadd.s32 1, %s19
    $region7: #{tpu_custom_call.1} parent=1 // loop_footer_branch
      %18 = sbr.rel target = $region3
    $region8: #{tpu_custom_call.1} parent=1 // loop_exit
      _
    %423 = vsyncpa [#allocation5], 1
    %s424 = scalar_lea.sflag [#allocation5], 1
    %425 = vsyncpa %s424, 1
    %426 = vsyncpa [#allocation9], 1
    %s427 = scalar_lea.sflag [#allocation9], 1
    %428 = vsyncpa %s427, 1
    %429 = vsyncpa [#allocation6], 1
    %s430 = scalar_lea.sflag [#allocation6], 1
    %431 = vsyncpa %s430, 1
    %432 = vsyncpa [#allocation7], 1
    %s433 = scalar_lea.sflag [#allocation7], 1
    %434 = vsyncpa %s433, 1

</llo_original>
